<compile_context>
chip_gen: v6e
topology: v6e:2x2x1
jax: 0.10.0
libtpu: 0.0.40
codegen_flags: <defaults>
</compile_context>

<pallas_src>
import functools

import jax
import jax.numpy as jnp
from jax import lax
from jax.experimental import pallas as pl
from jax.experimental.pallas import tpu as pltpu


def _round_up(a, b):
    return (a + b - 1) // b * b


def _time_block(seq, cap=32):
    """Largest divisor of seq that is <= cap (timesteps per grid step)."""
    for t in range(min(seq, cap), 0, -1):
        if seq % t == 0:
            return t
    return 1


def _reorder_gates(w):
    """Reorder PyTorch LSTM gate rows (i, f, g, o) -> (i, f, o, g) along axis 0."""
    H = w.shape[0] // 4
    return jnp.concatenate([w[:2 * H], w[3 * H:], w[2 * H:3 * H]], axis=0)


# ----------------------------------------------------------------------------
# LSTM recurrence kernel: grid over time blocks, h/c carried in VMEM scratch.
# Input gx = x @ Wih^T + (bih + bhh) is precomputed for all timesteps.
# ----------------------------------------------------------------------------
def _lstm_recur_kernel(gx_ref, whh_ref, h0_ref, c0_ref,
                       y_ref, hN_ref, cN_ref, h_sc, c_sc, *, H, T_BLK):
    tb = pl.program_id(0)

    @pl.when(tb == 0)
    def _():
        h_sc[...] = h0_ref[...]
        c_sc[...] = c0_ref[...]

    whh = whh_ref[...]                                   # (H, 4H) bf16, resident

    def step(t, carry):
        h, c = carry                                     # (bsz, H) f32
        g = gx_ref[t] + jnp.dot(h.astype(jnp.bfloat16), whh,
                                preferred_element_type=jnp.float32)   # (bsz, 4H)
        s = jax.nn.sigmoid(g[:, :3 * H])                 # one contiguous EUP region
        i_g = s[:, :H]
        f_g = s[:, H:2 * H]
        o_g = s[:, 2 * H:]
        g_g = jnp.tanh(g[:, 3 * H:])
        c_new = f_g * c + i_g * g_g
        h_new = o_g * jnp.tanh(c_new)
        y_ref[t] = h_new
        return h_new, c_new

    h_f, c_f = lax.fori_loop(0, T_BLK, step, (h_sc[...], c_sc[...]), unroll=True)
    h_sc[...] = h_f
    c_sc[...] = c_f

    # Resident output blocks: only write once, on the final time block.
    @pl.when(tb == pl.num_programs(0) - 1)
    def _():
        hN_ref[...] = h_f
        cN_ref[...] = c_f


def lstm_layer(x, wih, whh, bih, bhh, h0, c0):
    seq, bsz, in_sz = x.shape
    H = h0.shape[-1]
    T_BLK = _time_block(seq)

    # Host-side weight prep: gate reorder, pre-added bias, transpose, bf16 operands.
    wih_r = _reorder_gates(wih)                          # (4H, in)
    whh_t = _reorder_gates(whh).T.astype(jnp.bfloat16)   # (H, 4H)
    bias = _reorder_gates(bih + bhh)                     # (4H,)

    # Hoisted non-recurrent input projection: one matmul over ALL timesteps
    # (plain XLA; MXU-friendly shape), f32 accumulate.
    gx = jnp.einsum('tbi,gi->tbg',
                    x.astype(jnp.bfloat16), wih_r.astype(jnp.bfloat16),
                    preferred_element_type=jnp.float32) + bias[None, None, :]

    y, hN, cN = pl.pallas_call(
        functools.partial(_lstm_recur_kernel, H=H, T_BLK=T_BLK),
        grid=(seq // T_BLK,),
        in_specs=[
            pl.BlockSpec((T_BLK, bsz, 4 * H), lambda t: (t, 0, 0)),
            pl.BlockSpec((H, 4 * H), lambda t: (0, 0)),
            pl.BlockSpec((bsz, H), lambda t: (0, 0)),
            pl.BlockSpec((bsz, H), lambda t: (0, 0)),
        ],
        out_specs=[
            pl.BlockSpec((T_BLK, bsz, H), lambda t: (t, 0, 0)),
            pl.BlockSpec((bsz, H), lambda t: (0, 0)),
            pl.BlockSpec((bsz, H), lambda t: (0, 0)),
        ],
        out_shape=[
            jax.ShapeDtypeStruct((seq, bsz, H), jnp.float32),
            jax.ShapeDtypeStruct((bsz, H), jnp.float32),
            jax.ShapeDtypeStruct((bsz, H), jnp.float32),
        ],
        scratch_shapes=[pltpu.VMEM((bsz, H), jnp.float32),
                        pltpu.VMEM((bsz, H), jnp.float32)],
        compiler_params=pltpu.CompilerParams(
            dimension_semantics=("arbitrary",)),       # time axis is a recurrence
    )(gx, whh_t, h0, c0)
    return y, hN, cN


# ----------------------------------------------------------------------------
# Adaptive log-softmax-with-loss kernel (head + 2 tail clusters, div_value=2.0).
# Transposed layout: logits are (V, TN) with examples on the LANE axis, so the
# per-example result (target logit - logsumexp) is natively lane-dense (1, TN).
# Tiled over N (parallel grid axis).
# ----------------------------------------------------------------------------
def _asm_kernel(xt_ref, tgt_ref, headw_ref, t1w1_ref, t1w2_ref, t2w1_ref, t2w2_ref,
                out_ref, *, shortlist, cutoff1):
    xt = xt_ref[...].astype(jnp.bfloat16)                # (D, TN)
    tgt = tgt_ref[...]                                   # (1, TN) int32

    def gather_minus_lse(z, idx):
        # z: (V, TN) f32 logits; idx: (1, TN) target row per column.
        m = jnp.max(z, axis=0, keepdims=True)                              # (1, TN)
        lse = m + jnp.log(jnp.sum(jnp.exp(z - m), axis=0, keepdims=True))  # (1, TN)
        rows = lax.broadcasted_iota(jnp.int32, z.shape, 0)
        g = jnp.sum(jnp.where(rows == idx, z, 0.0), axis=0, keepdims=True)
        return g - lse                                                     # (1, TN)

    # head: Linear(D -> shortlist + n_clusters), no bias
    head_out = jnp.dot(headw_ref[...], xt, preferred_element_type=jnp.float32)
    in_short = tgt < shortlist
    in_c1 = jnp.logical_and(tgt >= shortlist, tgt < cutoff1)
    head_idx = jnp.where(in_short, tgt,
                         jnp.where(in_c1, shortlist, shortlist + 1))
    head_lp = gather_minus_lse(head_out, head_idx)

    # tail cluster 1: Linear(D -> hsz1) -> Linear(hsz1 -> osz1), no bias
    c1_hid = jnp.dot(t1w1_ref[...], xt, preferred_element_type=jnp.float32)
    c1_out = jnp.dot(t1w2_ref[...], c1_hid.astype(jnp.bfloat16),
                     preferred_element_type=jnp.float32)
    c1_lp = gather_minus_lse(c1_out, tgt - shortlist)

    # tail cluster 2
    c2_hid = jnp.dot(t2w1_ref[...], xt, preferred_element_type=jnp.float32)
    c2_out = jnp.dot(t2w2_ref[...], c2_hid.astype(jnp.bfloat16),
                     preferred_element_type=jnp.float32)
    c2_lp = gather_minus_lse(c2_out, tgt - cutoff1)

    # per-example log-prob of its target, lane-dense (1, TN)
    out_ref[...] = head_lp + jnp.where(in_short, 0.0,
                                       jnp.where(in_c1, c1_lp, c2_lp))


def adaptive_logsoftmax_with_loss(x, targets, head_w, t1w1, t1w2, t2w1, t2w2,
                                  shortlist, cutoff1):
    N, D = x.shape
    # Row tile: multiples of 128 lanes at realistic N; single tile for small N.
    TN = 128 if N >= 128 else _round_up(N, 8)
    N_pad = _round_up(N, TN)
    pad = N_pad - N

    xt = jnp.pad(x, ((0, pad), (0, 0))).T                # (D, N_pad)
    tgt = jnp.pad(targets.astype(jnp.int32), (0, pad)).reshape(1, N_pad)

    # Weights kept resident in VMEM (tiny here).
    # TODO(synk): for very large tail clusters, additionally tile the vocab dim.
    hw = head_w.astype(jnp.bfloat16)
    w11 = t1w1.astype(jnp.bfloat16)
    w12 = t1w2.astype(jnp.bfloat16)
    w21 = t2w1.astype(jnp.bfloat16)
    w22 = t2w2.astype(jnp.bfloat16)

    out = pl.pallas_call(
        functools.partial(_asm_kernel, shortlist=shortlist, cutoff1=cutoff1),
        grid=(N_pad // TN,),
        in_specs=[
            pl.BlockSpec((D, TN), lambda i: (0, i)),
            pl.BlockSpec((1, TN), lambda i: (0, i)),
            pl.BlockSpec(hw.shape, lambda i: (0, 0)),
            pl.BlockSpec(w11.shape, lambda i: (0, 0)),
            pl.BlockSpec(w12.shape, lambda i: (0, 0)),
            pl.BlockSpec(w21.shape, lambda i: (0, 0)),
            pl.BlockSpec(w22.shape, lambda i: (0, 0)),
        ],
        out_specs=pl.BlockSpec((1, TN), lambda i: (0, i)),
        out_shape=jax.ShapeDtypeStruct((1, N_pad), jnp.float32),
        compiler_params=pltpu.CompilerParams(
            dimension_semantics=("parallel",)),          # rows independent -> 2 TCs on v7x
    )(xt, tgt, hw, w11, w12, w21, w22)

    logprob = out[0, :N]
    loss = -jnp.mean(logprob)                            # plain-JAX glue, exact for ragged N
    return logprob, loss


# ----------------------------------------------------------------------------
# Full model forward
# ----------------------------------------------------------------------------
def adaptive_softmax_rnn_forward(params, input_ids, hidden, targets,
                                 *, nlayers, nhid, shortlist, cutoff1):
    # encoder (nn.Embedding) + emb_dropout(p=0.0): plain-JAX gather glue
    emb = params["embedding"][input_ids]                 # (seq, bsz, ninp)

    h0_all, c0_all = hidden
    x = emb
    h_out, c_out = [], []
    for l in range(nlayers):
        y, hN, cN = lstm_layer(
            x, params[f"wih_{l}"], params[f"whh_{l}"],
            params[f"bih_{l}"], params[f"bhh_{l}"],
            h0_all[l], c0_all[l])
        x = y                                            # rnn_dropout: eval identity
        h_out.append(hN)
        c_out.append(cN)

    # out_dropout(p=0.5): eval identity
    flat = x.reshape(-1, nhid)                           # (seq*bsz, nhid)
    logprob, loss = adaptive_logsoftmax_with_loss(
        flat, targets,
        params["head_w"], params["t1_w1"], params["t1_w2"],
        params["t2_w1"], params["t2_w2"],
        shortlist, cutoff1)
    hidden_out = (jnp.stack(h_out), jnp.stack(c_out))
    return logprob, hidden_out, loss


# ----------------------------------------------------------------------------
# Deterministic parameter init + run
# ----------------------------------------------------------------------------
if __name__ == "__main__":
    seq, bsz = 8, 2
    ntoken, ninp, nhid, nlayers = 64, 32, 32, 2
    cutoffs = [16, 32]                                   # must satisfy max < ntoken-1
    shortlist, cutoff1 = cutoffs[0], cutoffs[1]
    hsz1 = nhid // 2                                     # div_value = 2.0
    hsz2 = nhid // 4
    osz1 = cutoffs[1] - cutoffs[0]
    osz2 = ntoken - cutoffs[1]
    head_size = shortlist + 2                            # shortlist + n_clusters

    key = jax.random.PRNGKey(0)
    keys = jax.random.split(key, 16)

    def init(k, shape, scale=0.1):
        return (scale * jax.random.normal(k, shape)).astype(jnp.float32)

    params = {
        "embedding": init(keys[0], (ntoken, ninp)),
        # LSTM layer 0 (input ninp), layer 1 (input nhid); PyTorch gate order i,f,g,o
        "wih_0": init(keys[1], (4 * nhid, ninp)),
        "whh_0": init(keys[2], (4 * nhid, nhid)),
        "bih_0": init(keys[3], (4 * nhid,)),
        "bhh_0": init(keys[4], (4 * nhid,)),
        "wih_1": init(keys[5], (4 * nhid, nhid)),
        "whh_1": init(keys[6], (4 * nhid, nhid)),
        "bih_1": init(keys[7], (4 * nhid,)),
        "bhh_1": init(keys[8], (4 * nhid,)),
        # adaptive log-softmax decoder (all Linear, bias=False)
        "head_w": init(keys[9], (head_size, nhid)),
        "t1_w1": init(keys[10], (hsz1, nhid)),
        "t1_w2": init(keys[11], (osz1, hsz1)),
        "t2_w1": init(keys[12], (hsz2, nhid)),
        "t2_w2": init(keys[13], (osz2, hsz2)),
    }

    input_ids = jax.random.randint(keys[14], (seq, bsz), 0, ntoken, dtype=jnp.int32)
    targets = jax.random.randint(keys[15], (seq * bsz,), 0, ntoken, dtype=jnp.int32)
    hidden = (jnp.zeros((nlayers, bsz, nhid), jnp.float32),
              jnp.zeros((nlayers, bsz, nhid), jnp.float32))

    logprob, hidden_out, loss = adaptive_softmax_rnn_forward(
        params, input_ids, hidden, targets,
        nlayers=nlayers, nhid=nhid, shortlist=shortlist, cutoff1=cutoff1)

    jax.block_until_ready((logprob, hidden_out, loss))
    assert logprob.shape == (seq * bsz,)
    assert hidden_out[0].shape == (nlayers, bsz, nhid)
    assert hidden_out[1].shape == (nlayers, bsz, nhid)
    assert loss.shape == ()
    assert bool(jnp.isfinite(loss))
    print("KERNEL_OK")
</pallas_src>

<mosaic_0001>
module attributes {stable_mosaic.version = 11 : i64} {
  func.func @_lstm_recur_kernel(%arg0: i32, %arg1: memref<8x2x128xf32, #tpu.memory_space<vmem>>, %arg2: memref<32x128xbf16, #tpu.memory_space<vmem>>, %arg3: memref<2x32xf32, #tpu.memory_space<vmem>>, %arg4: memref<2x32xf32, #tpu.memory_space<vmem>>, %arg5: memref<8x2x32xf32, #tpu.memory_space<vmem>>, %arg6: memref<2x32xf32, #tpu.memory_space<vmem>>, %arg7: memref<2x32xf32, #tpu.memory_space<vmem>>, %arg8: memref<2x32xf32, #tpu.memory_space<vmem>>, %arg9: memref<2x32xf32, #tpu.memory_space<vmem>>) attributes {dimension_semantics = [#tpu.dimension_semantics<arbitrary>], iteration_bounds = array<i64: 1>, scalar_prefetch = 0 : i64, scratch_operands = 2 : i64, tpu.core_type = #tpu.core_type<tc>, window_params = [{transform_indices = @transform_0, window_bounds = array<i64: 8, 2, 128>}, {pipeline_mode = #tpu.pipeline_mode<synchronous>, transform_indices = @transform_1, window_bounds = array<i64: 32, 128>}, {pipeline_mode = #tpu.pipeline_mode<synchronous>, transform_indices = @transform_2, window_bounds = array<i64: 2, 32>}, {pipeline_mode = #tpu.pipeline_mode<synchronous>, transform_indices = @transform_3, window_bounds = array<i64: 2, 32>}, {transform_indices = @transform_4, window_bounds = array<i64: 8, 2, 32>}, {pipeline_mode = #tpu.pipeline_mode<synchronous>, transform_indices = @transform_5, window_bounds = array<i64: 2, 32>}, {pipeline_mode = #tpu.pipeline_mode<synchronous>, transform_indices = @transform_6, window_bounds = array<i64: 2, 32>}]} {
    %c0_i32 = arith.constant 0 : i32
    %0 = arith.cmpi eq, %arg0, %c0_i32 : i32
    %1 = arith.extui %0 : i1 to i32
    %c0_i32_0 = arith.constant 0 : i32
    %2 = arith.cmpi ne, %1, %c0_i32_0 : i32
    scf.if %2 {
      %c0_60 = arith.constant 0 : index
      %c0_61 = arith.constant 0 : index
      %219 = vector.load %arg3[%c0_60, %c0_61] : memref<2x32xf32, #tpu.memory_space<vmem>>, vector<2x32xf32>
      %c0_62 = arith.constant 0 : index
      %c0_63 = arith.constant 0 : index
      %220 = vector.load %arg8[%c0_62, %c0_63] : memref<2x32xf32, #tpu.memory_space<vmem>>, vector<2x32xf32>
      tpu.vector_store %arg8[%c0_62, %c0_63], %219 {strides = array<i32>} : memref<2x32xf32, #tpu.memory_space<vmem>>, vector<2x32xf32>,
      %c0_64 = arith.constant 0 : index
      %c0_65 = arith.constant 0 : index
      %221 = vector.load %arg4[%c0_64, %c0_65] : memref<2x32xf32, #tpu.memory_space<vmem>>, vector<2x32xf32>
      %c0_66 = arith.constant 0 : index
      %c0_67 = arith.constant 0 : index
      %222 = vector.load %arg9[%c0_66, %c0_67] : memref<2x32xf32, #tpu.memory_space<vmem>>, vector<2x32xf32>
      tpu.vector_store %arg9[%c0_66, %c0_67], %221 {strides = array<i32>} : memref<2x32xf32, #tpu.memory_space<vmem>>, vector<2x32xf32>,
    } else {
    }
    %c0 = arith.constant 0 : index
    %c0_1 = arith.constant 0 : index
    %3 = vector.load %arg2[%c0, %c0_1] : memref<32x128xbf16, #tpu.memory_space<vmem>>, vector<32x128xbf16>
    %c0_2 = arith.constant 0 : index
    %c0_3 = arith.constant 0 : index
    %4 = vector.load %arg8[%c0_2, %c0_3] : memref<2x32xf32, #tpu.memory_space<vmem>>, vector<2x32xf32>
    %c0_4 = arith.constant 0 : index
    %c0_5 = arith.constant 0 : index
    %5 = vector.load %arg9[%c0_4, %c0_5] : memref<2x32xf32, #tpu.memory_space<vmem>>, vector<2x32xf32>
    %c0_i32_6 = arith.constant 0 : i32
    %6 = arith.index_cast %c0_i32_6 : i32 to index
    %c0_7 = arith.constant 0 : index
    %c0_8 = arith.constant 0 : index
    %7 = vector.load %arg1[%6, %c0_7, %c0_8] : memref<8x2x128xf32, #tpu.memory_space<vmem>>, vector<1x2x128xf32>
    %8 = vector.shape_cast %7 : vector<1x2x128xf32> to vector<2x128xf32>
    %9 = arith.truncf %4 : vector<2x32xf32> to vector<2x32xbf16>
    %cst = arith.constant dense<0.000000e+00> : vector<2x128xf32>
    %10 = tpu.matmul %9, %3, %cst {dimension_numbers = #tpu.dot_dimension_numbers<[1], [0], [0], [1], [0, 0, 1, 1], [], []>} : vector<2x32xbf16>, vector<32x128xbf16>, vector<2x128xf32> -> vector<2x128xf32>
    %11 = arith.addf %8, %10 : vector<2x128xf32>
    %12 = vector.extract_strided_slice %11 {offsets = [0, 0], sizes = [2, 96], strides = [1, 1]} : vector<2x128xf32> to vector<2x96xf32>
    %13 = arith.negf %12 : vector<2x96xf32>
    %14 = math.exp %13 : vector<2x96xf32>
    %cst_9 = arith.constant 1.000000e+00 : f32
    %15 = vector.broadcast %cst_9 : f32 to vector<2x96xf32>
    %16 = arith.addf %15, %14 : vector<2x96xf32>
    %17 = arith.divf %15, %16 : vector<2x96xf32>
    %18 = vector.extract_strided_slice %17 {offsets = [0, 0], sizes = [2, 32], strides = [1, 1]} : vector<2x96xf32> to vector<2x32xf32>
    %19 = vector.extract_strided_slice %17 {offsets = [0, 32], sizes = [2, 32], strides = [1, 1]} : vector<2x96xf32> to vector<2x32xf32>
    %20 = vector.extract_strided_slice %17 {offsets = [0, 64], sizes = [2, 32], strides = [1, 1]} : vector<2x96xf32> to vector<2x32xf32>
    %21 = vector.extract_strided_slice %11 {offsets = [0, 96], sizes = [2, 32], strides = [1, 1]} : vector<2x128xf32> to vector<2x32xf32>
    %22 = math.tanh %21 : vector<2x32xf32>
    %23 = arith.mulf %19, %5 : vector<2x32xf32>
    %24 = arith.mulf %18, %22 : vector<2x32xf32>
    %25 = arith.addf %23, %24 : vector<2x32xf32>
    %26 = math.tanh %25 : vector<2x32xf32>
    %27 = arith.mulf %20, %26 : vector<2x32xf32>
    %28 = arith.index_cast %c0_i32_6 : i32 to index
    %c0_10 = arith.constant 0 : index
    %c0_11 = arith.constant 0 : index
    %29 = vector.load %arg5[%28, %c0_10, %c0_11] : memref<8x2x32xf32, #tpu.memory_space<vmem>>, vector<1x2x32xf32>
    %30 = vector.shape_cast %29 : vector<1x2x32xf32> to vector<2x32xf32>
    %31 = vector.shape_cast %27 : vector<2x32xf32> to vector<1x2x32xf32>
    tpu.vector_store %arg5[%28, %c0_10, %c0_11], %31 {strides = array<i32>} : memref<8x2x32xf32, #tpu.memory_space<vmem>>, vector<1x2x32xf32>,
    %c1_i32 = arith.constant 1 : i32
    %32 = arith.index_cast %c1_i32 : i32 to index
    %c0_12 = arith.constant 0 : index
    %c0_13 = arith.constant 0 : index
    %33 = vector.load %arg1[%32, %c0_12, %c0_13] : memref<8x2x128xf32, #tpu.memory_space<vmem>>, vector<1x2x128xf32>
    %34 = vector.shape_cast %33 : vector<1x2x128xf32> to vector<2x128xf32>
    %35 = arith.truncf %27 : vector<2x32xf32> to vector<2x32xbf16>
    %cst_14 = arith.constant dense<0.000000e+00> : vector<2x128xf32>
    %36 = tpu.matmul %35, %3, %cst_14 {dimension_numbers = #tpu.dot_dimension_numbers<[1], [0], [0], [1], [0, 0, 1, 1], [], []>} : vector<2x32xbf16>, vector<32x128xbf16>, vector<2x128xf32> -> vector<2x128xf32>
    %37 = arith.addf %34, %36 : vector<2x128xf32>
    %38 = vector.extract_strided_slice %37 {offsets = [0, 0], sizes = [2, 96], strides = [1, 1]} : vector<2x128xf32> to vector<2x96xf32>
    %39 = arith.negf %38 : vector<2x96xf32>
    %40 = math.exp %39 : vector<2x96xf32>
    %cst_15 = arith.constant 1.000000e+00 : f32
    %41 = vector.broadcast %cst_15 : f32 to vector<2x96xf32>
    %42 = arith.addf %41, %40 : vector<2x96xf32>
    %43 = arith.divf %41, %42 : vector<2x96xf32>
    %44 = vector.extract_strided_slice %43 {offsets = [0, 0], sizes = [2, 32], strides = [1, 1]} : vector<2x96xf32> to vector<2x32xf32>
    %45 = vector.extract_strided_slice %43 {offsets = [0, 32], sizes = [2, 32], strides = [1, 1]} : vector<2x96xf32> to vector<2x32xf32>
    %46 = vector.extract_strided_slice %43 {offsets = [0, 64], sizes = [2, 32], strides = [1, 1]} : vector<2x96xf32> to vector<2x32xf32>
    %47 = vector.extract_strided_slice %37 {offsets = [0, 96], sizes = [2, 32], strides = [1, 1]} : vector<2x128xf32> to vector<2x32xf32>
    %48 = math.tanh %47 : vector<2x32xf32>
    %49 = arith.mulf %45, %25 : vector<2x32xf32>
    %50 = arith.mulf %44, %48 : vector<2x32xf32>
    %51 = arith.addf %49, %50 : vector<2x32xf32>
    %52 = math.tanh %51 : vector<2x32xf32>
    %53 = arith.mulf %46, %52 : vector<2x32xf32>
    %54 = arith.index_cast %c1_i32 : i32 to index
    %c0_16 = arith.constant 0 : index
    %c0_17 = arith.constant 0 : index
    %55 = vector.load %arg5[%54, %c0_16, %c0_17] : memref<8x2x32xf32, #tpu.memory_space<vmem>>, vector<1x2x32xf32>
    %56 = vector.shape_cast %55 : vector<1x2x32xf32> to vector<2x32xf32>
    %57 = vector.shape_cast %53 : vector<2x32xf32> to vector<1x2x32xf32>
    tpu.vector_store %arg5[%54, %c0_16, %c0_17], %57 {strides = array<i32>} : memref<8x2x32xf32, #tpu.memory_space<vmem>>, vector<1x2x32xf32>,
    %c2_i32 = arith.constant 2 : i32
    %58 = arith.index_cast %c2_i32 : i32 to index
    %c0_18 = arith.constant 0 : index
    %c0_19 = arith.constant 0 : index
    %59 = vector.load %arg1[%58, %c0_18, %c0_19] : memref<8x2x128xf32, #tpu.memory_space<vmem>>, vector<1x2x128xf32>
    %60 = vector.shape_cast %59 : vector<1x2x128xf32> to vector<2x128xf32>
    %61 = arith.truncf %53 : vector<2x32xf32> to vector<2x32xbf16>
    %cst_20 = arith.constant dense<0.000000e+00> : vector<2x128xf32>
    %62 = tpu.matmul %61, %3, %cst_20 {dimension_numbers = #tpu.dot_dimension_numbers<[1], [0], [0], [1], [0, 0, 1, 1], [], []>} : vector<2x32xbf16>, vector<32x128xbf16>, vector<2x128xf32> -> vector<2x128xf32>
    %63 = arith.addf %60, %62 : vector<2x128xf32>
    %64 = vector.extract_strided_slice %63 {offsets = [0, 0], sizes = [2, 96], strides = [1, 1]} : vector<2x128xf32> to vector<2x96xf32>
    %65 = arith.negf %64 : vector<2x96xf32>
    %66 = math.exp %65 : vector<2x96xf32>
    %cst_21 = arith.constant 1.000000e+00 : f32
    %67 = vector.broadcast %cst_21 : f32 to vector<2x96xf32>
    %68 = arith.addf %67, %66 : vector<2x96xf32>
    %69 = arith.divf %67, %68 : vector<2x96xf32>
    %70 = vector.extract_strided_slice %69 {offsets = [0, 0], sizes = [2, 32], strides = [1, 1]} : vector<2x96xf32> to vector<2x32xf32>
    %71 = vector.extract_strided_slice %69 {offsets = [0, 32], sizes = [2, 32], strides = [1, 1]} : vector<2x96xf32> to vector<2x32xf32>
    %72 = vector.extract_strided_slice %69 {offsets = [0, 64], sizes = [2, 32], strides = [1, 1]} : vector<2x96xf32> to vector<2x32xf32>
    %73 = vector.extract_strided_slice %63 {offsets = [0, 96], sizes = [2, 32], strides = [1, 1]} : vector<2x128xf32> to vector<2x32xf32>
    %74 = math.tanh %73 : vector<2x32xf32>
    %75 = arith.mulf %71, %51 : vector<2x32xf32>
    %76 = arith.mulf %70, %74 : vector<2x32xf32>
    %77 = arith.addf %75, %76 : vector<2x32xf32>
    %78 = math.tanh %77 : vector<2x32xf32>
    %79 = arith.mulf %72, %78 : vector<2x32xf32>
    %80 = arith.index_cast %c2_i32 : i32 to index
    %c0_22 = arith.constant 0 : index
    %c0_23 = arith.constant 0 : index
    %81 = vector.load %arg5[%80, %c0_22, %c0_23] : memref<8x2x32xf32, #tpu.memory_space<vmem>>, vector<1x2x32xf32>
    %82 = vector.shape_cast %81 : vector<1x2x32xf32> to vector<2x32xf32>
    %83 = vector.shape_cast %79 : vector<2x32xf32> to vector<1x2x32xf32>
    tpu.vector_store %arg5[%80, %c0_22, %c0_23], %83 {strides = array<i32>} : memref<8x2x32xf32, #tpu.memory_space<vmem>>, vector<1x2x32xf32>,
    %c3_i32 = arith.constant 3 : i32
    %84 = arith.index_cast %c3_i32 : i32 to index
    %c0_24 = arith.constant 0 : index
    %c0_25 = arith.constant 0 : index
    %85 = vector.load %arg1[%84, %c0_24, %c0_25] : memref<8x2x128xf32, #tpu.memory_space<vmem>>, vector<1x2x128xf32>
    %86 = vector.shape_cast %85 : vector<1x2x128xf32> to vector<2x128xf32>
    %87 = arith.truncf %79 : vector<2x32xf32> to vector<2x32xbf16>
    %cst_26 = arith.constant dense<0.000000e+00> : vector<2x128xf32>
    %88 = tpu.matmul %87, %3, %cst_26 {dimension_numbers = #tpu.dot_dimension_numbers<[1], [0], [0], [1], [0, 0, 1, 1], [], []>} : vector<2x32xbf16>, vector<32x128xbf16>, vector<2x128xf32> -> vector<2x128xf32>
    %89 = arith.addf %86, %88 : vector<2x128xf32>
    %90 = vector.extract_strided_slice %89 {offsets = [0, 0], sizes = [2, 96], strides = [1, 1]} : vector<2x128xf32> to vector<2x96xf32>
    %91 = arith.negf %90 : vector<2x96xf32>
    %92 = math.exp %91 : vector<2x96xf32>
    %cst_27 = arith.constant 1.000000e+00 : f32
    %93 = vector.broadcast %cst_27 : f32 to vector<2x96xf32>
    %94 = arith.addf %93, %92 : vector<2x96xf32>
    %95 = arith.divf %93, %94 : vector<2x96xf32>
    %96 = vector.extract_strided_slice %95 {offsets = [0, 0], sizes = [2, 32], strides = [1, 1]} : vector<2x96xf32> to vector<2x32xf32>
    %97 = vector.extract_strided_slice %95 {offsets = [0, 32], sizes = [2, 32], strides = [1, 1]} : vector<2x96xf32> to vector<2x32xf32>
    %98 = vector.extract_strided_slice %95 {offsets = [0, 64], sizes = [2, 32], strides = [1, 1]} : vector<2x96xf32> to vector<2x32xf32>
    %99 = vector.extract_strided_slice %89 {offsets = [0, 96], sizes = [2, 32], strides = [1, 1]} : vector<2x128xf32> to vector<2x32xf32>
    %100 = math.tanh %99 : vector<2x32xf32>
    %101 = arith.mulf %97, %77 : vector<2x32xf32>
    %102 = arith.mulf %96, %100 : vector<2x32xf32>
    %103 = arith.addf %101, %102 : vector<2x32xf32>
    %104 = math.tanh %103 : vector<2x32xf32>
    %105 = arith.mulf %98, %104 : vector<2x32xf32>
    %106 = arith.index_cast %c3_i32 : i32 to index
    %c0_28 = arith.constant 0 : index
    %c0_29 = arith.constant 0 : index
    %107 = vector.load %arg5[%106, %c0_28, %c0_29] : memref<8x2x32xf32, #tpu.memory_space<vmem>>, vector<1x2x32xf32>
    %108 = vector.shape_cast %107 : vector<1x2x32xf32> to vector<2x32xf32>
    %109 = vector.shape_cast %105 : vector<2x32xf32> to vector<1x2x32xf32>
    tpu.vector_store %arg5[%106, %c0_28, %c0_29], %109 {strides = array<i32>} : memref<8x2x32xf32, #tpu.memory_space<vmem>>, vector<1x2x32xf32>,
    %c4_i32 = arith.constant 4 : i32
    %110 = arith.index_cast %c4_i32 : i32 to index
    %c0_30 = arith.constant 0 : index
    %c0_31 = arith.constant 0 : index
    %111 = vector.load %arg1[%110, %c0_30, %c0_31] : memref<8x2x128xf32, #tpu.memory_space<vmem>>, vector<1x2x128xf32>
    %112 = vector.shape_cast %111 : vector<1x2x128xf32> to vector<2x128xf32>
    %113 = arith.truncf %105 : vector<2x32xf32> to vector<2x32xbf16>
    %cst_32 = arith.constant dense<0.000000e+00> : vector<2x128xf32>
    %114 = tpu.matmul %113, %3, %cst_32 {dimension_numbers = #tpu.dot_dimension_numbers<[1], [0], [0], [1], [0, 0, 1, 1], [], []>} : vector<2x32xbf16>, vector<32x128xbf16>, vector<2x128xf32> -> vector<2x128xf32>
    %115 = arith.addf %112, %114 : vector<2x128xf32>
    %116 = vector.extract_strided_slice %115 {offsets = [0, 0], sizes = [2, 96], strides = [1, 1]} : vector<2x128xf32> to vector<2x96xf32>
    %117 = arith.negf %116 : vector<2x96xf32>
    %118 = math.exp %117 : vector<2x96xf32>
    %cst_33 = arith.constant 1.000000e+00 : f32
    %119 = vector.broadcast %cst_33 : f32 to vector<2x96xf32>
    %120 = arith.addf %119, %118 : vector<2x96xf32>
    %121 = arith.divf %119, %120 : vector<2x96xf32>
    %122 = vector.extract_strided_slice %121 {offsets = [0, 0], sizes = [2, 32], strides = [1, 1]} : vector<2x96xf32> to vector<2x32xf32>
    %123 = vector.extract_strided_slice %121 {offsets = [0, 32], sizes = [2, 32], strides = [1, 1]} : vector<2x96xf32> to vector<2x32xf32>
    %124 = vector.extract_strided_slice %121 {offsets = [0, 64], sizes = [2, 32], strides = [1, 1]} : vector<2x96xf32> to vector<2x32xf32>
    %125 = vector.extract_strided_slice %115 {offsets = [0, 96], sizes = [2, 32], strides = [1, 1]} : vector<2x128xf32> to vector<2x32xf32>
    %126 = math.tanh %125 : vector<2x32xf32>
    %127 = arith.mulf %123, %103 : vector<2x32xf32>
    %128 = arith.mulf %122, %126 : vector<2x32xf32>
    %129 = arith.addf %127, %128 : vector<2x32xf32>
    %130 = math.tanh %129 : vector<2x32xf32>
    %131 = arith.mulf %124, %130 : vector<2x32xf32>
    %132 = arith.index_cast %c4_i32 : i32 to index
    %c0_34 = arith.constant 0 : index
    %c0_35 = arith.constant 0 : index
    %133 = vector.load %arg5[%132, %c0_34, %c0_35] : memref<8x2x32xf32, #tpu.memory_space<vmem>>, vector<1x2x32xf32>
    %134 = vector.shape_cast %133 : vector<1x2x32xf32> to vector<2x32xf32>
    %135 = vector.shape_cast %131 : vector<2x32xf32> to vector<1x2x32xf32>
    tpu.vector_store %arg5[%132, %c0_34, %c0_35], %135 {strides = array<i32>} : memref<8x2x32xf32, #tpu.memory_space<vmem>>, vector<1x2x32xf32>,
    %c5_i32 = arith.constant 5 : i32
    %136 = arith.index_cast %c5_i32 : i32 to index
    %c0_36 = arith.constant 0 : index
    %c0_37 = arith.constant 0 : index
    %137 = vector.load %arg1[%136, %c0_36, %c0_37] : memref<8x2x128xf32, #tpu.memory_space<vmem>>, vector<1x2x128xf32>
    %138 = vector.shape_cast %137 : vector<1x2x128xf32> to vector<2x128xf32>
    %139 = arith.truncf %131 : vector<2x32xf32> to vector<2x32xbf16>
    %cst_38 = arith.constant dense<0.000000e+00> : vector<2x128xf32>
    %140 = tpu.matmul %139, %3, %cst_38 {dimension_numbers = #tpu.dot_dimension_numbers<[1], [0], [0], [1], [0, 0, 1, 1], [], []>} : vector<2x32xbf16>, vector<32x128xbf16>, vector<2x128xf32> -> vector<2x128xf32>
    %141 = arith.addf %138, %140 : vector<2x128xf32>
    %142 = vector.extract_strided_slice %141 {offsets = [0, 0], sizes = [2, 96], strides = [1, 1]} : vector<2x128xf32> to vector<2x96xf32>
    %143 = arith.negf %142 : vector<2x96xf32>
    %144 = math.exp %143 : vector<2x96xf32>
    %cst_39 = arith.constant 1.000000e+00 : f32
    %145 = vector.broadcast %cst_39 : f32 to vector<2x96xf32>
    %146 = arith.addf %145, %144 : vector<2x96xf32>
    %147 = arith.divf %145, %146 : vector<2x96xf32>
    %148 = vector.extract_strided_slice %147 {offsets = [0, 0], sizes = [2, 32], strides = [1, 1]} : vector<2x96xf32> to vector<2x32xf32>
    %149 = vector.extract_strided_slice %147 {offsets = [0, 32], sizes = [2, 32], strides = [1, 1]} : vector<2x96xf32> to vector<2x32xf32>
    %150 = vector.extract_strided_slice %147 {offsets = [0, 64], sizes = [2, 32], strides = [1, 1]} : vector<2x96xf32> to vector<2x32xf32>
    %151 = vector.extract_strided_slice %141 {offsets = [0, 96], sizes = [2, 32], strides = [1, 1]} : vector<2x128xf32> to vector<2x32xf32>
    %152 = math.tanh %151 : vector<2x32xf32>
    %153 = arith.mulf %149, %129 : vector<2x32xf32>
    %154 = arith.mulf %148, %152 : vector<2x32xf32>
    %155 = arith.addf %153, %154 : vector<2x32xf32>
    %156 = math.tanh %155 : vector<2x32xf32>
    %157 = arith.mulf %150, %156 : vector<2x32xf32>
    %158 = arith.index_cast %c5_i32 : i32 to index
    %c0_40 = arith.constant 0 : index
    %c0_41 = arith.constant 0 : index
    %159 = vector.load %arg5[%158, %c0_40, %c0_41] : memref<8x2x32xf32, #tpu.memory_space<vmem>>, vector<1x2x32xf32>
    %160 = vector.shape_cast %159 : vector<1x2x32xf32> to vector<2x32xf32>
    %161 = vector.shape_cast %157 : vector<2x32xf32> to vector<1x2x32xf32>
    tpu.vector_store %arg5[%158, %c0_40, %c0_41], %161 {strides = array<i32>} : memref<8x2x32xf32, #tpu.memory_space<vmem>>, vector<1x2x32xf32>,
    %c6_i32 = arith.constant 6 : i32
    %162 = arith.index_cast %c6_i32 : i32 to index
    %c0_42 = arith.constant 0 : index
    %c0_43 = arith.constant 0 : index
    %163 = vector.load %arg1[%162, %c0_42, %c0_43] : memref<8x2x128xf32, #tpu.memory_space<vmem>>, vector<1x2x128xf32>
    %164 = vector.shape_cast %163 : vector<1x2x128xf32> to vector<2x128xf32>
    %165 = arith.truncf %157 : vector<2x32xf32> to vector<2x32xbf16>
    %cst_44 = arith.constant dense<0.000000e+00> : vector<2x128xf32>
    %166 = tpu.matmul %165, %3, %cst_44 {dimension_numbers = #tpu.dot_dimension_numbers<[1], [0], [0], [1], [0, 0, 1, 1], [], []>} : vector<2x32xbf16>, vector<32x128xbf16>, vector<2x128xf32> -> vector<2x128xf32>
    %167 = arith.addf %164, %166 : vector<2x128xf32>
    %168 = vector.extract_strided_slice %167 {offsets = [0, 0], sizes = [2, 96], strides = [1, 1]} : vector<2x128xf32> to vector<2x96xf32>
    %169 = arith.negf %168 : vector<2x96xf32>
    %170 = math.exp %169 : vector<2x96xf32>
    %cst_45 = arith.constant 1.000000e+00 : f32
    %171 = vector.broadcast %cst_45 : f32 to vector<2x96xf32>
    %172 = arith.addf %171, %170 : vector<2x96xf32>
    %173 = arith.divf %171, %172 : vector<2x96xf32>
    %174 = vector.extract_strided_slice %173 {offsets = [0, 0], sizes = [2, 32], strides = [1, 1]} : vector<2x96xf32> to vector<2x32xf32>
    %175 = vector.extract_strided_slice %173 {offsets = [0, 32], sizes = [2, 32], strides = [1, 1]} : vector<2x96xf32> to vector<2x32xf32>
    %176 = vector.extract_strided_slice %173 {offsets = [0, 64], sizes = [2, 32], strides = [1, 1]} : vector<2x96xf32> to vector<2x32xf32>
    %177 = vector.extract_strided_slice %167 {offsets = [0, 96], sizes = [2, 32], strides = [1, 1]} : vector<2x128xf32> to vector<2x32xf32>
    %178 = math.tanh %177 : vector<2x32xf32>
    %179 = arith.mulf %175, %155 : vector<2x32xf32>
    %180 = arith.mulf %174, %178 : vector<2x32xf32>
    %181 = arith.addf %179, %180 : vector<2x32xf32>
    %182 = math.tanh %181 : vector<2x32xf32>
    %183 = arith.mulf %176, %182 : vector<2x32xf32>
    %184 = arith.index_cast %c6_i32 : i32 to index
    %c0_46 = arith.constant 0 : index
    %c0_47 = arith.constant 0 : index
    %185 = vector.load %arg5[%184, %c0_46, %c0_47] : memref<8x2x32xf32, #tpu.memory_space<vmem>>, vector<1x2x32xf32>
    %186 = vector.shape_cast %185 : vector<1x2x32xf32> to vector<2x32xf32>
    %187 = vector.shape_cast %183 : vector<2x32xf32> to vector<1x2x32xf32>
    tpu.vector_store %arg5[%184, %c0_46, %c0_47], %187 {strides = array<i32>} : memref<8x2x32xf32, #tpu.memory_space<vmem>>, vector<1x2x32xf32>,
    %c7_i32 = arith.constant 7 : i32
    %188 = arith.index_cast %c7_i32 : i32 to index
    %c0_48 = arith.constant 0 : index
    %c0_49 = arith.constant 0 : index
    %189 = vector.load %arg1[%188, %c0_48, %c0_49] : memref<8x2x128xf32, #tpu.memory_space<vmem>>, vector<1x2x128xf32>
    %190 = vector.shape_cast %189 : vector<1x2x128xf32> to vector<2x128xf32>
    %191 = arith.truncf %183 : vector<2x32xf32> to vector<2x32xbf16>
    %cst_50 = arith.constant dense<0.000000e+00> : vector<2x128xf32>
    %192 = tpu.matmul %191, %3, %cst_50 {dimension_numbers = #tpu.dot_dimension_numbers<[1], [0], [0], [1], [0, 0, 1, 1], [], []>} : vector<2x32xbf16>, vector<32x128xbf16>, vector<2x128xf32> -> vector<2x128xf32>
    %193 = arith.addf %190, %192 : vector<2x128xf32>
    %194 = vector.extract_strided_slice %193 {offsets = [0, 0], sizes = [2, 96], strides = [1, 1]} : vector<2x128xf32> to vector<2x96xf32>
    %195 = arith.negf %194 : vector<2x96xf32>
    %196 = math.exp %195 : vector<2x96xf32>
    %cst_51 = arith.constant 1.000000e+00 : f32
    %197 = vector.broadcast %cst_51 : f32 to vector<2x96xf32>
    %198 = arith.addf %197, %196 : vector<2x96xf32>
    %199 = arith.divf %197, %198 : vector<2x96xf32>
    %200 = vector.extract_strided_slice %199 {offsets = [0, 0], sizes = [2, 32], strides = [1, 1]} : vector<2x96xf32> to vector<2x32xf32>
    %201 = vector.extract_strided_slice %199 {offsets = [0, 32], sizes = [2, 32], strides = [1, 1]} : vector<2x96xf32> to vector<2x32xf32>
    %202 = vector.extract_strided_slice %199 {offsets = [0, 64], sizes = [2, 32], strides = [1, 1]} : vector<2x96xf32> to vector<2x32xf32>
    %203 = vector.extract_strided_slice %193 {offsets = [0, 96], sizes = [2, 32], strides = [1, 1]} : vector<2x128xf32> to vector<2x32xf32>
    %204 = math.tanh %203 : vector<2x32xf32>
    %205 = arith.mulf %201, %181 : vector<2x32xf32>
    %206 = arith.mulf %200, %204 : vector<2x32xf32>
    %207 = arith.addf %205, %206 : vector<2x32xf32>
    %208 = math.tanh %207 : vector<2x32xf32>
    %209 = arith.mulf %202, %208 : vector<2x32xf32>
    %210 = arith.index_cast %c7_i32 : i32 to index
    %c0_52 = arith.constant 0 : index
    %c0_53 = arith.constant 0 : index
    %211 = vector.load %arg5[%210, %c0_52, %c0_53] : memref<8x2x32xf32, #tpu.memory_space<vmem>>, vector<1x2x32xf32>
    %212 = vector.shape_cast %211 : vector<1x2x32xf32> to vector<2x32xf32>
    %213 = vector.shape_cast %209 : vector<2x32xf32> to vector<1x2x32xf32>
    tpu.vector_store %arg5[%210, %c0_52, %c0_53], %213 {strides = array<i32>} : memref<8x2x32xf32, #tpu.memory_space<vmem>>, vector<1x2x32xf32>,
    %c8_i32 = arith.constant 8 : i32
    %c0_54 = arith.constant 0 : index
    %c0_55 = arith.constant 0 : index
    %214 = vector.load %arg8[%c0_54, %c0_55] : memref<2x32xf32, #tpu.memory_space<vmem>>, vector<2x32xf32>
    tpu.vector_store %arg8[%c0_54, %c0_55], %209 {strides = array<i32>} : memref<2x32xf32, #tpu.memory_space<vmem>>, vector<2x32xf32>,
    %c0_56 = arith.constant 0 : index
    %c0_57 = arith.constant 0 : index
    %215 = vector.load %arg9[%c0_56, %c0_57] : memref<2x32xf32, #tpu.memory_space<vmem>>, vector<2x32xf32>
    tpu.vector_store %arg9[%c0_56, %c0_57], %207 {strides = array<i32>} : memref<2x32xf32, #tpu.memory_space<vmem>>, vector<2x32xf32>,
    %c0_i32_58 = arith.constant 0 : i32
    %216 = arith.cmpi eq, %arg0, %c0_i32_58 : i32
    %217 = arith.extui %216 : i1 to i32
    %c0_i32_59 = arith.constant 0 : i32
    %218 = arith.cmpi ne, %217, %c0_i32_59 : i32
    scf.if %218 {
      %c0_60 = arith.constant 0 : index
      %c0_61 = arith.constant 0 : index
      %219 = vector.load %arg6[%c0_60, %c0_61] : memref<2x32xf32, #tpu.memory_space<vmem>>, vector<2x32xf32>
      tpu.vector_store %arg6[%c0_60, %c0_61], %209 {strides = array<i32>} : memref<2x32xf32, #tpu.memory_space<vmem>>, vector<2x32xf32>,
      %c0_62 = arith.constant 0 : index
      %c0_63 = arith.constant 0 : index
      %220 = vector.load %arg7[%c0_62, %c0_63] : memref<2x32xf32, #tpu.memory_space<vmem>>, vector<2x32xf32>
      tpu.vector_store %arg7[%c0_62, %c0_63], %207 {strides = array<i32>} : memref<2x32xf32, #tpu.memory_space<vmem>>, vector<2x32xf32>,
    } else {
    }
    return
  }
  func.func @transform_0(%arg0: i32) -> (i32, i32, i32) {
    %c0_i32 = arith.constant 0 : i32
    %c0_i32_0 = arith.constant 0 : i32
    %c0_i32_1 = arith.constant 0 : i32
    return %arg0, %c0_i32, %c0_i32_0 : i32, i32, i32
  }
  func.func @transform_1(%arg0: i32) -> (i32, i32) {
    %c0_i32 = arith.constant 0 : i32
    %c0_i32_0 = arith.constant 0 : i32
    %c0_i32_1 = arith.constant 0 : i32
    return %c0_i32, %c0_i32_0 : i32, i32
  }
  func.func @transform_2(%arg0: i32) -> (i32, i32) {
    %c0_i32 = arith.constant 0 : i32
    %c0_i32_0 = arith.constant 0 : i32
    %c0_i32_1 = arith.constant 0 : i32
    return %c0_i32, %c0_i32_0 : i32, i32
  }
  func.func @transform_3(%arg0: i32) -> (i32, i32) {
    %c0_i32 = arith.constant 0 : i32
    %c0_i32_0 = arith.constant 0 : i32
    %c0_i32_1 = arith.constant 0 : i32
    return %c0_i32, %c0_i32_0 : i32, i32
  }
  func.func @transform_4(%arg0: i32) -> (i32, i32, i32) {
    %c0_i32 = arith.constant 0 : i32
    %c0_i32_0 = arith.constant 0 : i32
    %c0_i32_1 = arith.constant 0 : i32
    return %arg0, %c0_i32, %c0_i32_0 : i32, i32, i32
  }
  func.func @transform_5(%arg0: i32) -> (i32, i32) {
    %c0_i32 = arith.constant 0 : i32
    %c0_i32_0 = arith.constant 0 : i32
    %c0_i32_1 = arith.constant 0 : i32
    return %c0_i32, %c0_i32_0 : i32, i32
  }
  func.func @transform_6(%arg0: i32) -> (i32, i32) {
    %c0_i32 = arith.constant 0 : i32
    %c0_i32_0 = arith.constant 0 : i32
    %c0_i32_1 = arith.constant 0 : i32
    return %c0_i32, %c0_i32_0 : i32, i32
  }
}

</mosaic_0001>

<llo_original>
// kernel: tpu_custom_call.1
$region0: #{tpu_custom_call.1}
  #allocation0 [shape = 'u32[]', space=smem, size = 0x4, offset = 0x4, fixed_abs, tag = 'smem constant byte address 0x4 - core index']
  #allocation1 [shape = 'u32[144,128]{1,0:T(1,128)}', space=vmem, size = 0x12000, scoped, tag = 'internal scratch']
  #allocation2 [shape = 'f32[2,32]{1,0:T(2,128)}', space=vmem, size = 0x400, scoped, tag = 'scratch operand']
  #allocation3 [shape = 'f32[2,32]{1,0:T(2,128)}', space=vmem, size = 0x400, scoped, tag = 'scratch operand']
  %s0 = inlined_call_operand.hbm [shape: f32[8,2,128], index: 0, kind: input, shape index: {}]
  %s1 = inlined_call_operand.hbm [shape: bf16[32,128], index: 1, kind: input, shape index: {}]
  %s2 = inlined_call_operand.vmem [shape: f32[2,32], index: 2, kind: input, shape index: {}]
  %s3 = inlined_call_operand.vmem [shape: f32[2,32], index: 3, kind: input, shape index: {}]
  %s4 = inlined_call_operand.hbm [shape: f32[8,2,32], index: 4, kind: output, shape index: {0}]
  %s5 = inlined_call_operand.hbm [shape: f32[2,32], index: 5, kind: output, shape index: {1}]
  %s6 = inlined_call_operand.hbm [shape: f32[2,32], index: 6, kind: output, shape index: {2}]
  %7 = xla_tuple %s4, %s5, %s6
  %s8 = sld [smem:[#allocation0]]
  $region58: #{tpu_custom_call.1} parent=0
    _
  %s10 = ssub.s32 1, %s8
  %s11 = scalar_select 0, %s10, %s8
  $region1: #{tpu_custom_call.1} parent=0
    #allocation4 [shape = 'u8[8192]{0}', space=vmem, size = 0x2000, scoped, tag = 'input window, operand 0, single buffered']
    #allocation5 [shape = 's32[1]{0}', space=sflag, size = 0x4, scoped, tag = 'scoped memory for tpu_custom_call.1']
    #allocation6 [shape = 's32[1]{0}', space=sflag, size = 0x4, scoped, tag = 'scoped memory for tpu_custom_call.1']
    #allocation7 [shape = 'u8[8192]{0}', space=vmem, size = 0x2000, scoped, tag = 'input window, operand 1, single buffered']
    #allocation8 [shape = 's32[1]{0}', space=sflag, size = 0x4, scoped, tag = 'scoped memory for tpu_custom_call.1']
    #allocation9 [shape = 'u8[8192]{0}', space=vmem, size = 0x2000, scoped, tag = 'output window, operand 0, single buffered']
    #allocation10 [shape = 'u8[1024]{0}', space=vmem, size = 0x400, scoped, tag = 'output window, operand 1, single buffered']
    #allocation11 [shape = 's32[1]{0}', space=sflag, size = 0x4, scoped, tag = 'scoped memory for tpu_custom_call.1']
    #allocation12 [shape = 'u8[1024]{0}', space=vmem, size = 0x400, scoped, tag = 'output window, operand 2, single buffered']
    %12 = vsyncpa [#allocation5], 0
    %13 = vsyncpa [#allocation8], 0
    %14 = vsyncpa [#allocation6], 0
    %15 = vsyncpa [#allocation11], 0
    // Predicated region
    $region2: #{tpu_custom_call.1} parent=1 // pred_check
      _
    $region3: #{tpu_custom_call.1} parent=1 // pred_check_branch
      %17 = sbr.rel (0) target = $region5
    $region4: #{tpu_custom_call.1} parent=1 // pred_region
      %s19 = ssub.s32 256, 256
      %20 = vsyncadd [#allocation5], %s19
      %s21 = sshll.u32 [#allocation4], 4
      %s22 = int_to_ptr.vmem [resolvable:$true] %s21
      %27 = dma.hbm_to_vmem [thread:$0]  %s0, 256, %s22, [#allocation5], 32, 32, 2
    $region5: #{tpu_custom_call.1} parent=1 // pred_fallthru
      _
    // Predicated region
    $region6: #{tpu_custom_call.1} parent=1 // pred_check
      _
    $region7: #{tpu_custom_call.1} parent=1 // pred_check_branch
      %29 = sbr.rel (0) target = $region9
    $region8: #{tpu_custom_call.1} parent=1 // pred_region
      %s31 = ssub.s32 256, 256
      %32 = vsyncadd [#allocation8], %s31
      %s33 = sshll.u32 [#allocation7], 4
      %s34 = int_to_ptr.vmem [resolvable:$true] %s33
      %39 = dma.hbm_to_vmem [thread:$0]  %s1, 256, %s34, [#allocation8], 64, 64, 4
    $region9: #{tpu_custom_call.1} parent=1 // pred_fallthru
      _
    // Predicated region
    $region10: #{tpu_custom_call.1} parent=1 // pred_check
      _
    $region11: #{tpu_custom_call.1} parent=1 // pred_check_branch
      %41 = sbr.rel (0) target = $region13
    $region12: #{tpu_custom_call.1} parent=1 // pred_region
      _
    $region13: #{tpu_custom_call.1} parent=1 // pred_fallthru
      _
    // Predicated region
    $region14: #{tpu_custom_call.1} parent=1 // pred_check
      _
    $region15: #{tpu_custom_call.1} parent=1 // pred_check_branch
      %43 = sbr.rel (0) target = $region17
    $region16: #{tpu_custom_call.1} parent=1 // pred_region
      _
    $region17: #{tpu_custom_call.1} parent=1 // pred_fallthru
      _
    // Predicated region
    $region18: #{tpu_custom_call.1} parent=1 // pred_check
      _
    $region19: #{tpu_custom_call.1} parent=1 // pred_check_branch
      %45 = sbr.rel (0) target = $region21
    $region20: #{tpu_custom_call.1} parent=1 // pred_region
      %46 = dma.done [#allocation5], 256
    $region21: #{tpu_custom_call.1} parent=1 // pred_fallthru
      _
    // Predicated region
    $region22: #{tpu_custom_call.1} parent=1 // pred_check
      _
    $region23: #{tpu_custom_call.1} parent=1 // pred_check_branch
      %48 = sbr.rel (0) target = $region25
    $region24: #{tpu_custom_call.1} parent=1 // pred_region
      %49 = dma.done [#allocation8], 256
    $region25: #{tpu_custom_call.1} parent=1 // pred_fallthru
      _
    %p51 = scmp.eq.s32.totalorder 0, 0
    // Predicated region
    $region26: #{tpu_custom_call.1} parent=1 // pred_check
      %p52 = pneg %p51
    $region27: #{tpu_custom_call.1} parent=1 // pred_check_branch
      %54 = sbr.rel (%p52) target = $region29
    $region28: #{tpu_custom_call.1} parent=1 // pred_region
      %v55 = vld [vmem:[%s2] sm:$0x3]
      %vm56 = vcmask 254976
      %57 = vst.msk [vmem:[#allocation2] sm:$0x3] %vm56, %v55
      %v58 = vld [vmem:[%s3] sm:$0x3]
      %59 = vst.msk [vmem:[#allocation3] sm:$0x3] %vm56, %v58
    $region29: #{tpu_custom_call.1} parent=1 // pred_fallthru
      _
    %v60 = vld [vmem:[#allocation7] sm:$0xf]
    %v61 = vld [vmem:[#allocation7 + $0x4] sm:$0xf]
    %v62 = vld [vmem:[#allocation7 + $0x8] sm:$0xf]
    %v63 = vld [vmem:[#allocation7 + $0xc] sm:$0xf]
    %v64 = vld [vmem:[#allocation2] sm:$0x3]
    %v65 = vld [vmem:[#allocation3] sm:$0x3]
    %v66 = vld [vmem:[#allocation4] sm:$0x3]
    %v67 = vpack.c.bf16 %v64, %v64
    %v72 = vunpack.c.l.b16 %v60
    %v73 = vunpack.c.l.b16 %v61
    %v74 = vunpack.c.l.b16 %v62
    %v75 = vunpack.c.l.b16 %v63
    %v76 = vpack.c.b16 %v73, %v72
    %v77 = vpack.c.b16 %v75, %v74
    %vm80 = vcmask 261120
    %v82 = vsel %vm80, %v67, 0
    %84 = vmatprep.subr.bf16.mxu0 0
    %85 = vmatpush1.bf16.msra.mxu0 0
    %86 = vmatprep.subr.bf16.mxu0 0
    %87 = vmatpush1.bf16.msra.mxu0 0
    %88 = vmatprep.subr.bf16.mxu0 0
    %89 = vmatpush1.bf16.msra.mxu0 0
    %90 = vmatprep.subr.bf16.mxu0 0
    %91 = vmatpush1.bf16.msra.mxu0 0
    %92 = vmatprep.subr.bf16.mxu0 0
    %93 = vmatpush1.bf16.msra.mxu0 0
    %94 = vmatprep.subr.bf16.mxu0 0
    %95 = vmatpush1.bf16.msra.mxu0 0
    %96 = vmatprep.subr.bf16.mxu0 0
    %97 = vmatpush1.bf16.msra.mxu0 %v77
    %98 = vmatprep.subr.bf16.mxu0 0
    %99 = vmatpush1.bf16.msra.mxu0 %v76
    %100 = vmatprep.subr.bf16.mxu0 0
    %101 = vmatpush2.bf16.msra.mxu0 0
    %102 = vmatprep.subr.bf16.mxu0 0
    %103 = vmatpush2.bf16.msra.mxu0 0
    %104 = vmatprep.subr.bf16.mxu0 0
    %105 = vmatpush2.bf16.msra.mxu0 0
    %106 = vmatprep.subr.bf16.mxu0 0
    %107 = vmatpush2.bf16.msra.mxu0 0
    %108 = vmatprep.subr.bf16.mxu0 0
    %109 = vmatpush2.bf16.msra.mxu0 0
    %110 = vmatprep.subr.bf16.mxu0 0
    %111 = vmatpush2.bf16.msra.mxu0 0
    %112 = vmatprep.subr.bf16.mxu0 0
    %113 = vmatpush2.bf16.msra.mxu0 0
    %114 = vmatprep.subr.bf16.mxu0 0
    %115 = vmatpush2.bf16.msra.mxu0 0
    %116 = vmatprep.mubr.bf16.mxu0 0
    %117 = vmatmul.mubr.bf16.gmra.mxu0 %v82
    %v118 = vpop.f32.mrf.mxu0
    %v119 = vadd.f32 0.0, %v118
    %v120 = vpop.f32.mrf.mxu0
    %v121 = vpop.f32.mrf.mxu0
    %v122 = vpop.f32.mrf.mxu0
    %123 = vdwg.mxu0
    %v124 = vadd.f32 %v66, %v119
    %v125 = vxor.u32 %v124, 2147483648
    %v126 = vmul.f32 %v125, 1.442695
    %v127 = vpow.pop %v126
    %v128 = vadd.f32 %v127, 1.0
    %v129 = vrcp.pop %v128
    %v130 = vmul.f32 1.0, %v129
    %v131 = vtanh.pop %v124
    %133 = vrot.lane.b32.xlu0 %v65, 32
    %v134 = vpop.permute.xlu0 %133
    %v136 = vmul.f32 %v130, %v134
    %138 = vrot.lane.b32.xlu0 %v131, 32
    %v139 = vpop.permute.xlu0 %138
    %v141 = vmul.f32 %v130, %v139
    %143 = vrot.lane.b32.xlu0 %v141, 32
    %v144 = vpop.permute.xlu0 %143
    %v146 = vadd.f32 %v136, %v144
    %v147 = vtanh.pop %v146
    %149 = vrot.lane.b32.xlu0 %v147, 32
    %v150 = vpop.permute.xlu0 %149
    %v152 = vmul.f32 %v130, %v150
    %154 = vrot.lane.b32.xlu0 %v152, 64
    %v155 = vpop.permute.xlu0 %154
    %vm157 = vcmask 254976
    %158 = vst.msk [vmem:[#allocation9] sm:$0x3] %vm157, %v155
    %s159 = scalar_lea.vmem [#allocation4], 2
    %v160 = vld [vmem:[%s159] sm:$0x3]
    %v161 = vpack.c.bf16 %v152, %v152
    %163 = vrot.lane.b32.xlu0 %v161, 64
    %v164 = vpop.permute.xlu0 %163
    %v166 = vsel %vm80, %v164, 0
    %168 = vmatprep.subr.bf16.mxu0 0
    %169 = vmatpush1.bf16.msra.mxu0 0
    %170 = vmatprep.subr.bf16.mxu0 0
    %171 = vmatpush1.bf16.msra.mxu0 0
    %172 = vmatprep.subr.bf16.mxu0 0
    %173 = vmatpush1.bf16.msra.mxu0 0
    %174 = vmatprep.subr.bf16.mxu0 0
    %175 = vmatpush1.bf16.msra.mxu0 0
    %176 = vmatprep.subr.bf16.mxu0 0
    %177 = vmatpush1.bf16.msra.mxu0 0
    %178 = vmatprep.subr.bf16.mxu0 0
    %179 = vmatpush1.bf16.msra.mxu0 0
    %180 = vmatprep.subr.bf16.mxu0 0
    %181 = vmatpush1.bf16.msra.mxu0 %v77
    %182 = vmatprep.subr.bf16.mxu0 0
    %183 = vmatpush1.bf16.msra.mxu0 %v76
    %184 = vmatprep.subr.bf16.mxu0 0
    %185 = vmatpush2.bf16.msra.mxu0 0
    %186 = vmatprep.subr.bf16.mxu0 0
    %187 = vmatpush2.bf16.msra.mxu0 0
    %188 = vmatprep.subr.bf16.mxu0 0
    %189 = vmatpush2.bf16.msra.mxu0 0
    %190 = vmatprep.subr.bf16.mxu0 0
    %191 = vmatpush2.bf16.msra.mxu0 0
    %192 = vmatprep.subr.bf16.mxu0 0
    %193 = vmatpush2.bf16.msra.mxu0 0
    %194 = vmatprep.subr.bf16.mxu0 0
    %195 = vmatpush2.bf16.msra.mxu0 0
    %196 = vmatprep.subr.bf16.mxu0 0
    %197 = vmatpush2.bf16.msra.mxu0 0
    %198 = vmatprep.subr.bf16.mxu0 0
    %199 = vmatpush2.bf16.msra.mxu0 0
    %200 = vmatprep.mubr.bf16.mxu0 0
    %201 = vmatmul.mubr.bf16.gmra.mxu0 %v166
    %v202 = vpop.f32.mrf.mxu0
    %v203 = vadd.f32 0.0, %v202
    %v204 = vpop.f32.mrf.mxu0
    %v205 = vpop.f32.mrf.mxu0
    %v206 = vpop.f32.mrf.mxu0
    %207 = vdwg.mxu0
    %v208 = vadd.f32 %v160, %v203
    %v209 = vxor.u32 %v208, 2147483648
    %v210 = vmul.f32 %v209, 1.442695
    %v211 = vpow.pop %v210
    %v212 = vadd.f32 %v211, 1.0
    %v213 = vrcp.pop %v212
    %v214 = vmul.f32 1.0, %v213
    %v215 = vtanh.pop %v208
    %v216 = vmul.f32 %v214, %v146
    %218 = vrot.lane.b32.xlu0 %v215, 32
    %v219 = vpop.permute.xlu0 %218
    %v221 = vmul.f32 %v214, %v219
    %223 = vrot.lane.b32.xlu0 %v221, 32
    %v224 = vpop.permute.xlu0 %223
    %v226 = vadd.f32 %v216, %v224
    %v227 = vtanh.pop %v226
    %229 = vrot.lane.b32.xlu0 %v227, 32
    %v230 = vpop.permute.xlu0 %229
    %v232 = vmul.f32 %v214, %v230
    %234 = vrot.lane.b32.xlu0 %v232, 64
    %v235 = vpop.permute.xlu0 %234
    %s237 = scalar_lea.vmem [#allocation9], 2
    %238 = vst.msk [vmem:[%s237] sm:$0x3] %vm157, %v235
    %s239 = scalar_lea.vmem [#allocation4], 4
    %v240 = vld [vmem:[%s239] sm:$0x3]
    %v241 = vpack.c.bf16 %v232, %v232
    %243 = vrot.lane.b32.xlu0 %v241, 64
    %v244 = vpop.permute.xlu0 %243
    %v246 = vsel %vm80, %v244, 0
    %248 = vmatprep.subr.bf16.mxu0 0
    %249 = vmatpush1.bf16.msra.mxu0 0
    %250 = vmatprep.subr.bf16.mxu0 0
    %251 = vmatpush1.bf16.msra.mxu0 0
    %252 = vmatprep.subr.bf16.mxu0 0
    %253 = vmatpush1.bf16.msra.mxu0 0
    %254 = vmatprep.subr.bf16.mxu0 0
    %255 = vmatpush1.bf16.msra.mxu0 0
    %256 = vmatprep.subr.bf16.mxu0 0
    %257 = vmatpush1.bf16.msra.mxu0 0
    %258 = vmatprep.subr.bf16.mxu0 0
    %259 = vmatpush1.bf16.msra.mxu0 0
    %260 = vmatprep.subr.bf16.mxu0 0
    %261 = vmatpush1.bf16.msra.mxu0 %v77
    %262 = vmatprep.subr.bf16.mxu0 0
    %263 = vmatpush1.bf16.msra.mxu0 %v76
    %264 = vmatprep.subr.bf16.mxu0 0
    %265 = vmatpush2.bf16.msra.mxu0 0
    %266 = vmatprep.subr.bf16.mxu0 0
    %267 = vmatpush2.bf16.msra.mxu0 0
    %268 = vmatprep.subr.bf16.mxu0 0
    %269 = vmatpush2.bf16.msra.mxu0 0
    %270 = vmatprep.subr.bf16.mxu0 0
    %271 = vmatpush2.bf16.msra.mxu0 0
    %272 = vmatprep.subr.bf16.mxu0 0
    %273 = vmatpush2.bf16.msra.mxu0 0
    %274 = vmatprep.subr.bf16.mxu0 0
    %275 = vmatpush2.bf16.msra.mxu0 0
    %276 = vmatprep.subr.bf16.mxu0 0
    %277 = vmatpush2.bf16.msra.mxu0 0
    %278 = vmatprep.subr.bf16.mxu0 0
    %279 = vmatpush2.bf16.msra.mxu0 0
    %280 = vmatprep.mubr.bf16.mxu0 0
    %281 = vmatmul.mubr.bf16.gmra.mxu0 %v246
    %v282 = vpop.f32.mrf.mxu0
    %v283 = vadd.f32 0.0, %v282
    %v284 = vpop.f32.mrf.mxu0
    %v285 = vpop.f32.mrf.mxu0
    %v286 = vpop.f32.mrf.mxu0
    %287 = vdwg.mxu0
    %v288 = vadd.f32 %v240, %v283
    %v289 = vxor.u32 %v288, 2147483648
    %v290 = vmul.f32 %v289, 1.442695
    %v291 = vpow.pop %v290
    %v292 = vadd.f32 %v291, 1.0
    %v293 = vrcp.pop %v292
    %v294 = vmul.f32 1.0, %v293
    %v295 = vtanh.pop %v288
    %v296 = vmul.f32 %v294, %v226
    %298 = vrot.lane.b32.xlu0 %v295, 32
    %v299 = vpop.permute.xlu0 %298
    %v301 = vmul.f32 %v294, %v299
    %303 = vrot.lane.b32.xlu0 %v301, 32
    %v304 = vpop.permute.xlu0 %303
    %v306 = vadd.f32 %v296, %v304
    %v307 = vtanh.pop %v306
    %309 = vrot.lane.b32.xlu0 %v307, 32
    %v310 = vpop.permute.xlu0 %309
    %v312 = vmul.f32 %v294, %v310
    %314 = vrot.lane.b32.xlu0 %v312, 64
    %v315 = vpop.permute.xlu0 %314
    %s317 = scalar_lea.vmem [#allocation9], 4
    %318 = vst.msk [vmem:[%s317] sm:$0x3] %vm157, %v315
    %s319 = scalar_lea.vmem [#allocation4], 6
    %v320 = vld [vmem:[%s319] sm:$0x3]
    %v321 = vpack.c.bf16 %v312, %v312
    %323 = vrot.lane.b32.xlu0 %v321, 64
    %v324 = vpop.permute.xlu0 %323
    %v326 = vsel %vm80, %v324, 0
    %328 = vmatprep.subr.bf16.mxu0 0
    %329 = vmatpush1.bf16.msra.mxu0 0
    %330 = vmatprep.subr.bf16.mxu0 0
    %331 = vmatpush1.bf16.msra.mxu0 0
    %332 = vmatprep.subr.bf16.mxu0 0
    %333 = vmatpush1.bf16.msra.mxu0 0
    %334 = vmatprep.subr.bf16.mxu0 0
    %335 = vmatpush1.bf16.msra.mxu0 0
    %336 = vmatprep.subr.bf16.mxu0 0
    %337 = vmatpush1.bf16.msra.mxu0 0
    %338 = vmatprep.subr.bf16.mxu0 0
    %339 = vmatpush1.bf16.msra.mxu0 0
    %340 = vmatprep.subr.bf16.mxu0 0
    %341 = vmatpush1.bf16.msra.mxu0 %v77
    %342 = vmatprep.subr.bf16.mxu0 0
    %343 = vmatpush1.bf16.msra.mxu0 %v76
    %344 = vmatprep.subr.bf16.mxu0 0
    %345 = vmatpush2.bf16.msra.mxu0 0
    %346 = vmatprep.subr.bf16.mxu0 0
    %347 = vmatpush2.bf16.msra.mxu0 0
    %348 = vmatprep.subr.bf16.mxu0 0
    %349 = vmatpush2.bf16.msra.mxu0 0
    %350 = vmatprep.subr.bf16.mxu0 0
    %351 = vmatpush2.bf16.msra.mxu0 0
    %352 = vmatprep.subr.bf16.mxu0 0
    %353 = vmatpush2.bf16.msra.mxu0 0
    %354 = vmatprep.subr.bf16.mxu0 0
    %355 = vmatpush2.bf16.msra.mxu0 0
    %356 = vmatprep.subr.bf16.mxu0 0
    %357 = vmatpush2.bf16.msra.mxu0 0
    %358 = vmatprep.subr.bf16.mxu0 0
    %359 = vmatpush2.bf16.msra.mxu0 0
    %360 = vmatprep.mubr.bf16.mxu0 0
    %361 = vmatmul.mubr.bf16.gmra.mxu0 %v326
    %v362 = vpop.f32.mrf.mxu0
    %v363 = vadd.f32 0.0, %v362
    %v364 = vpop.f32.mrf.mxu0
    %v365 = vpop.f32.mrf.mxu0
    %v366 = vpop.f32.mrf.mxu0
    %367 = vdwg.mxu0
    %v368 = vadd.f32 %v320, %v363
    %v369 = vxor.u32 %v368, 2147483648
    %v370 = vmul.f32 %v369, 1.442695
    %v371 = vpow.pop %v370
    %v372 = vadd.f32 %v371, 1.0
    %v373 = vrcp.pop %v372
    %v374 = vmul.f32 1.0, %v373
    %v375 = vtanh.pop %v368
    %v376 = vmul.f32 %v374, %v306
    %378 = vrot.lane.b32.xlu0 %v375, 32
    %v379 = vpop.permute.xlu0 %378
    %v381 = vmul.f32 %v374, %v379
    %383 = vrot.lane.b32.xlu0 %v381, 32
    %v384 = vpop.permute.xlu0 %383
    %v386 = vadd.f32 %v376, %v384
    %v387 = vtanh.pop %v386
    %389 = vrot.lane.b32.xlu0 %v387, 32
    %v390 = vpop.permute.xlu0 %389
    %v392 = vmul.f32 %v374, %v390
    %394 = vrot.lane.b32.xlu0 %v392, 64
    %v395 = vpop.permute.xlu0 %394
    %s397 = scalar_lea.vmem [#allocation9], 6
    %398 = vst.msk [vmem:[%s397] sm:$0x3] %vm157, %v395
    %s399 = scalar_lea.vmem [#allocation4], 8
    %v400 = vld [vmem:[%s399] sm:$0x3]
    %v401 = vpack.c.bf16 %v392, %v392
    %403 = vrot.lane.b32.xlu0 %v401, 64
    %v404 = vpop.permute.xlu0 %403
    %v406 = vsel %vm80, %v404, 0
    %408 = vmatprep.subr.bf16.mxu0 0
    %409 = vmatpush1.bf16.msra.mxu0 0
    %410 = vmatprep.subr.bf16.mxu0 0
    %411 = vmatpush1.bf16.msra.mxu0 0
    %412 = vmatprep.subr.bf16.mxu0 0
    %413 = vmatpush1.bf16.msra.mxu0 0
    %414 = vmatprep.subr.bf16.mxu0 0
    %415 = vmatpush1.bf16.msra.mxu0 0
    %416 = vmatprep.subr.bf16.mxu0 0
    %417 = vmatpush1.bf16.msra.mxu0 0
    %418 = vmatprep.subr.bf16.mxu0 0
    %419 = vmatpush1.bf16.msra.mxu0 0
    %420 = vmatprep.subr.bf16.mxu0 0
    %421 = vmatpush1.bf16.msra.mxu0 %v77
    %422 = vmatprep.subr.bf16.mxu0 0
    %423 = vmatpush1.bf16.msra.mxu0 %v76
    %424 = vmatprep.subr.bf16.mxu0 0
    %425 = vmatpush2.bf16.msra.mxu0 0
    %426 = vmatprep.subr.bf16.mxu0 0
    %427 = vmatpush2.bf16.msra.mxu0 0
    %428 = vmatprep.subr.bf16.mxu0 0
    %429 = vmatpush2.bf16.msra.mxu0 0
    %430 = vmatprep.subr.bf16.mxu0 0
    %431 = vmatpush2.bf16.msra.mxu0 0
    %432 = vmatprep.subr.bf16.mxu0 0
    %433 = vmatpush2.bf16.msra.mxu0 0
    %434 = vmatprep.subr.bf16.mxu0 0
    %435 = vmatpush2.bf16.msra.mxu0 0
    %436 = vmatprep.subr.bf16.mxu0 0
    %437 = vmatpush2.bf16.msra.mxu0 0
    %438 = vmatprep.subr.bf16.mxu0 0
    %439 = vmatpush2.bf16.msra.mxu0 0
    %440 = vmatprep.mubr.bf16.mxu0 0
    %441 = vmatmul.mubr.bf16.gmra.mxu0 %v406
    %v442 = vpop.f32.mrf.mxu0
    %v443 = vadd.f32 0.0, %v442
    %v444 = vpop.f32.mrf.mxu0
    %v445 = vpop.f32.mrf.mxu0
    %v446 = vpop.f32.mrf.mxu0
    %447 = vdwg.mxu0
    %v448 = vadd.f32 %v400, %v443
    %v449 = vxor.u32 %v448, 2147483648
    %v450 = vmul.f32 %v449, 1.442695
    %v451 = vpow.pop %v450
    %v452 = vadd.f32 %v451, 1.0
    %v453 = vrcp.pop %v452
    %v454 = vmul.f32 1.0, %v453
    %v455 = vtanh.pop %v448
    %v456 = vmul.f32 %v454, %v386
    %458 = vrot.lane.b32.xlu0 %v455, 32
    %v459 = vpop.permute.xlu0 %458
    %v461 = vmul.f32 %v454, %v459
    %463 = vrot.lane.b32.xlu0 %v461, 32
    %v464 = vpop.permute.xlu0 %463
    %v466 = vadd.f32 %v456, %v464
    %v467 = vtanh.pop %v466
    %469 = vrot.lane.b32.xlu0 %v467, 32
    %v470 = vpop.permute.xlu0 %469
    %v472 = vmul.f32 %v454, %v470
    %474 = vrot.lane.b32.xlu0 %v472, 64
    %v475 = vpop.permute.xlu0 %474
    %s477 = scalar_lea.vmem [#allocation9], 8
    %478 = vst.msk [vmem:[%s477] sm:$0x3] %vm157, %v475
    %s479 = scalar_lea.vmem [#allocation4], 10
    %v480 = vld [vmem:[%s479] sm:$0x3]
    %v481 = vpack.c.bf16 %v472, %v472
    %483 = vrot.lane.b32.xlu0 %v481, 64
    %v484 = vpop.permute.xlu0 %483
    %v486 = vsel %vm80, %v484, 0
    %488 = vmatprep.subr.bf16.mxu0 0
    %489 = vmatpush1.bf16.msra.mxu0 0
    %490 = vmatprep.subr.bf16.mxu0 0
    %491 = vmatpush1.bf16.msra.mxu0 0
    %492 = vmatprep.subr.bf16.mxu0 0
    %493 = vmatpush1.bf16.msra.mxu0 0
    %494 = vmatprep.subr.bf16.mxu0 0
    %495 = vmatpush1.bf16.msra.mxu0 0
    %496 = vmatprep.subr.bf16.mxu0 0
    %497 = vmatpush1.bf16.msra.mxu0 0
    %498 = vmatprep.subr.bf16.mxu0 0
    %499 = vmatpush1.bf16.msra.mxu0 0
    %500 = vmatprep.subr.bf16.mxu0 0
    %501 = vmatpush1.bf16.msra.mxu0 %v77
    %502 = vmatprep.subr.bf16.mxu0 0
    %503 = vmatpush1.bf16.msra.mxu0 %v76
    %504 = vmatprep.subr.bf16.mxu0 0
    %505 = vmatpush2.bf16.msra.mxu0 0
    %506 = vmatprep.subr.bf16.mxu0 0
    %507 = vmatpush2.bf16.msra.mxu0 0
    %508 = vmatprep.subr.bf16.mxu0 0
    %509 = vmatpush2.bf16.msra.mxu0 0
    %510 = vmatprep.subr.bf16.mxu0 0
    %511 = vmatpush2.bf16.msra.mxu0 0
    %512 = vmatprep.subr.bf16.mxu0 0
    %513 = vmatpush2.bf16.msra.mxu0 0
    %514 = vmatprep.subr.bf16.mxu0 0
    %515 = vmatpush2.bf16.msra.mxu0 0
    %516 = vmatprep.subr.bf16.mxu0 0
    %517 = vmatpush2.bf16.msra.mxu0 0
    %518 = vmatprep.subr.bf16.mxu0 0
    %519 = vmatpush2.bf16.msra.mxu0 0
    %520 = vmatprep.mubr.bf16.mxu0 0
    %521 = vmatmul.mubr.bf16.gmra.mxu0 %v486
    %v522 = vpop.f32.mrf.mxu0
    %v523 = vadd.f32 0.0, %v522
    %v524 = vpop.f32.mrf.mxu0
    %v525 = vpop.f32.mrf.mxu0
    %v526 = vpop.f32.mrf.mxu0
    %527 = vdwg.mxu0
    %v528 = vadd.f32 %v480, %v523
    %v529 = vxor.u32 %v528, 2147483648
    %v530 = vmul.f32 %v529, 1.442695
    %v531 = vpow.pop %v530
    %v532 = vadd.f32 %v531, 1.0
    %v533 = vrcp.pop %v532
    %v534 = vmul.f32 1.0, %v533
    %v535 = vtanh.pop %v528
    %v536 = vmul.f32 %v534, %v466
    %538 = vrot.lane.b32.xlu0 %v535, 32
    %v539 = vpop.permute.xlu0 %538
    %v541 = vmul.f32 %v534, %v539
    %543 = vrot.lane.b32.xlu0 %v541, 32
    %v544 = vpop.permute.xlu0 %543
    %v546 = vadd.f32 %v536, %v544
    %v547 = vtanh.pop %v546
    %549 = vrot.lane.b32.xlu0 %v547, 32
    %v550 = vpop.permute.xlu0 %549
    %v552 = vmul.f32 %v534, %v550
    %554 = vrot.lane.b32.xlu0 %v552, 64
    %v555 = vpop.permute.xlu0 %554
    %s557 = scalar_lea.vmem [#allocation9], 10
    %558 = vst.msk [vmem:[%s557] sm:$0x3] %vm157, %v555
    %s559 = scalar_lea.vmem [#allocation4], 12
    %v560 = vld [vmem:[%s559] sm:$0x3]
    %v561 = vpack.c.bf16 %v552, %v552
    %563 = vrot.lane.b32.xlu0 %v561, 64
    %v564 = vpop.permute.xlu0 %563
    %v566 = vsel %vm80, %v564, 0
    %568 = vmatprep.subr.bf16.mxu0 0
    %569 = vmatpush1.bf16.msra.mxu0 0
    %570 = vmatprep.subr.bf16.mxu0 0
    %571 = vmatpush1.bf16.msra.mxu0 0
    %572 = vmatprep.subr.bf16.mxu0 0
    %573 = vmatpush1.bf16.msra.mxu0 0
    %574 = vmatprep.subr.bf16.mxu0 0
    %575 = vmatpush1.bf16.msra.mxu0 0
    %576 = vmatprep.subr.bf16.mxu0 0
    %577 = vmatpush1.bf16.msra.mxu0 0
    %578 = vmatprep.subr.bf16.mxu0 0
    %579 = vmatpush1.bf16.msra.mxu0 0
    %580 = vmatprep.subr.bf16.mxu0 0
    %581 = vmatpush1.bf16.msra.mxu0 %v77
    %582 = vmatprep.subr.bf16.mxu0 0
    %583 = vmatpush1.bf16.msra.mxu0 %v76
    %584 = vmatprep.subr.bf16.mxu0 0
    %585 = vmatpush2.bf16.msra.mxu0 0
    %586 = vmatprep.subr.bf16.mxu0 0
    %587 = vmatpush2.bf16.msra.mxu0 0
    %588 = vmatprep.subr.bf16.mxu0 0
    %589 = vmatpush2.bf16.msra.mxu0 0
    %590 = vmatprep.subr.bf16.mxu0 0
    %591 = vmatpush2.bf16.msra.mxu0 0
    %592 = vmatprep.subr.bf16.mxu0 0
    %593 = vmatpush2.bf16.msra.mxu0 0
    %594 = vmatprep.subr.bf16.mxu0 0
    %595 = vmatpush2.bf16.msra.mxu0 0
    %596 = vmatprep.subr.bf16.mxu0 0
    %597 = vmatpush2.bf16.msra.mxu0 0
    %598 = vmatprep.subr.bf16.mxu0 0
    %599 = vmatpush2.bf16.msra.mxu0 0
    %600 = vmatprep.mubr.bf16.mxu0 0
    %601 = vmatmul.mubr.bf16.gmra.mxu0 %v566
    %v602 = vpop.f32.mrf.mxu0
    %v603 = vadd.f32 0.0, %v602
    %v604 = vpop.f32.mrf.mxu0
    %v605 = vpop.f32.mrf.mxu0
    %v606 = vpop.f32.mrf.mxu0
    %607 = vdwg.mxu0
    %v608 = vadd.f32 %v560, %v603
    %v609 = vxor.u32 %v608, 2147483648
    %v610 = vmul.f32 %v609, 1.442695
    %v611 = vpow.pop %v610
    %v612 = vadd.f32 %v611, 1.0
    %v613 = vrcp.pop %v612
    %v614 = vmul.f32 1.0, %v613
    %v615 = vtanh.pop %v608
    %v616 = vmul.f32 %v614, %v546
    %618 = vrot.lane.b32.xlu0 %v615, 32
    %v619 = vpop.permute.xlu0 %618
    %v621 = vmul.f32 %v614, %v619
    %623 = vrot.lane.b32.xlu0 %v621, 32
    %v624 = vpop.permute.xlu0 %623
    %v626 = vadd.f32 %v616, %v624
    %v627 = vtanh.pop %v626
    %629 = vrot.lane.b32.xlu0 %v627, 32
    %v630 = vpop.permute.xlu0 %629
    %v632 = vmul.f32 %v614, %v630
    %634 = vrot.lane.b32.xlu0 %v632, 64
    %v635 = vpop.permute.xlu0 %634
    %s637 = scalar_lea.vmem [#allocation9], 12
    %638 = vst.msk [vmem:[%s637] sm:$0x3] %vm157, %v635
    %s639 = scalar_lea.vmem [#allocation4], 14
    %v640 = vld [vmem:[%s639] sm:$0x3]
    %v641 = vpack.c.bf16 %v632, %v632
    %643 = vrot.lane.b32.xlu0 %v641, 64
    %v644 = vpop.permute.xlu0 %643
    %v646 = vsel %vm80, %v644, 0
    %648 = vmatprep.subr.bf16.mxu0 0
    %649 = vmatpush1.bf16.msra.mxu0 0
    %650 = vmatprep.subr.bf16.mxu0 0
    %651 = vmatpush1.bf16.msra.mxu0 0
    %652 = vmatprep.subr.bf16.mxu0 0
    %653 = vmatpush1.bf16.msra.mxu0 0
    %654 = vmatprep.subr.bf16.mxu0 0
    %655 = vmatpush1.bf16.msra.mxu0 0
    %656 = vmatprep.subr.bf16.mxu0 0
    %657 = vmatpush1.bf16.msra.mxu0 0
    %658 = vmatprep.subr.bf16.mxu0 0
    %659 = vmatpush1.bf16.msra.mxu0 0
    %660 = vmatprep.subr.bf16.mxu0 0
    %661 = vmatpush1.bf16.msra.mxu0 %v77
    %662 = vmatprep.subr.bf16.mxu0 0
    %663 = vmatpush1.bf16.msra.mxu0 %v76
    %664 = vmatprep.subr.bf16.mxu0 0
    %665 = vmatpush2.bf16.msra.mxu0 0
    %666 = vmatprep.subr.bf16.mxu0 0
    %667 = vmatpush2.bf16.msra.mxu0 0
    %668 = vmatprep.subr.bf16.mxu0 0
    %669 = vmatpush2.bf16.msra.mxu0 0
    %670 = vmatprep.subr.bf16.mxu0 0
    %671 = vmatpush2.bf16.msra.mxu0 0
    %672 = vmatprep.subr.bf16.mxu0 0
    %673 = vmatpush2.bf16.msra.mxu0 0
    %674 = vmatprep.subr.bf16.mxu0 0
    %675 = vmatpush2.bf16.msra.mxu0 0
    %676 = vmatprep.subr.bf16.mxu0 0
    %677 = vmatpush2.bf16.msra.mxu0 0
    %678 = vmatprep.subr.bf16.mxu0 0
    %679 = vmatpush2.bf16.msra.mxu0 0
    %680 = vmatprep.mubr.bf16.mxu0 0
    %681 = vmatmul.mubr.bf16.gmra.mxu0 %v646
    %v682 = vpop.f32.mrf.mxu0
    %v683 = vadd.f32 0.0, %v682
    %v684 = vpop.f32.mrf.mxu0
    %v685 = vpop.f32.mrf.mxu0
    %v686 = vpop.f32.mrf.mxu0
    %687 = vdwg.mxu0
    %v688 = vadd.f32 %v640, %v683
    %v689 = vxor.u32 %v688, 2147483648
    %v690 = vmul.f32 %v689, 1.442695
    %v691 = vpow.pop %v690
    %v692 = vadd.f32 %v691, 1.0
    %v693 = vrcp.pop %v692
    %v694 = vmul.f32 1.0, %v693
    %v695 = vtanh.pop %v688
    %v696 = vmul.f32 %v694, %v626
    %698 = vrot.lane.b32.xlu0 %v695, 32
    %v699 = vpop.permute.xlu0 %698
    %v701 = vmul.f32 %v694, %v699
    %703 = vrot.lane.b32.xlu0 %v701, 32
    %v704 = vpop.permute.xlu0 %703
    %v706 = vadd.f32 %v696, %v704
    %v707 = vtanh.pop %v706
    %709 = vrot.lane.b32.xlu0 %v707, 32
    %v710 = vpop.permute.xlu0 %709
    %v712 = vmul.f32 %v694, %v710
    %714 = vrot.lane.b32.xlu0 %v712, 64
    %v715 = vpop.permute.xlu0 %714
    %s717 = scalar_lea.vmem [#allocation9], 14
    %718 = vst.msk [vmem:[%s717] sm:$0x3] %vm157, %v715
    %719 = vst.msk [vmem:[#allocation2] sm:$0x3] %vm157, %v715
    %721 = vrot.lane.b32.xlu0 %v706, 96
    %v722 = vpop.permute.xlu0 %721
    %724 = vst.msk [vmem:[#allocation3] sm:$0x3] %vm157, %v722
    // Predicated region
    $region30: #{tpu_custom_call.1} parent=1 // pred_check
      %p725 = pneg %p51
    $region31: #{tpu_custom_call.1} parent=1 // pred_check_branch
      %727 = sbr.rel (%p725) target = $region33
    $region32: #{tpu_custom_call.1} parent=1 // pred_region
      %728 = vst.msk [vmem:[#allocation10] sm:$0x3] %vm157, %v715
      %729 = vst.msk [vmem:[#allocation12] sm:$0x3] %vm157, %v722
    $region33: #{tpu_custom_call.1} parent=1 // pred_fallthru
      _
    // Predicated region
    $region34: #{tpu_custom_call.1} parent=1 // pred_check
      _
    $region35: #{tpu_custom_call.1} parent=1 // pred_check_branch
      %731 = sbr.rel (0) target = $region37
    $region36: #{tpu_custom_call.1} parent=1 // pred_region
      %s733 = ssub.s32 256, 256
      %734 = vsyncadd [#allocation6], %s733
      %s735 = sshll.u32 [#allocation9], 4
      %s736 = int_to_ptr.vmem [resolvable:$true] %s735
      %741 = dma.vmem_to_hbm [thread:$0]  %s736, 256, %s4, [#allocation6], 32, 32, 2
    $region37: #{tpu_custom_call.1} parent=1 // pred_fallthru
      _
    // Predicated region
    $region38: #{tpu_custom_call.1} parent=1 // pred_check
      _
    $region39: #{tpu_custom_call.1} parent=1 // pred_check_branch
      %743 = sbr.rel (0) target = $region41
    $region40: #{tpu_custom_call.1} parent=1 // pred_region
      %s745 = ssub.s32 32, 32
      %746 = vsyncadd [#allocation11], %s745
      %s748 = sshll.u32 [#allocation10], 4
      %s749 = int_to_ptr.vmem [resolvable:$true] %s748
      %751 = dma.vmem_to_hbm [thread:$0]  %s749, 32, %s5, [#allocation11]
    $region41: #{tpu_custom_call.1} parent=1 // pred_fallthru
      _
    // Predicated region
    $region42: #{tpu_custom_call.1} parent=1 // pred_check
      _
    $region43: #{tpu_custom_call.1} parent=1 // pred_check_branch
      %753 = sbr.rel (0) target = $region45
    $region44: #{tpu_custom_call.1} parent=1 // pred_region
      %s755 = ssub.s32 32, 32
      %756 = vsyncadd [#allocation11], %s755
      %s758 = sshll.u32 [#allocation12], 4
      %s759 = int_to_ptr.vmem [resolvable:$true] %s758
      %761 = dma.vmem_to_hbm [thread:$0]  %s759, 32, %s6, [#allocation11]
    $region45: #{tpu_custom_call.1} parent=1 // pred_fallthru
      _
    // Predicated region
    $region46: #{tpu_custom_call.1} parent=1 // pred_check
      _
    $region47: #{tpu_custom_call.1} parent=1 // pred_check_branch
      %763 = sbr.rel (0) target = $region49
    $region48: #{tpu_custom_call.1} parent=1 // pred_region
      %764 = dma.done [#allocation6], 256
    $region49: #{tpu_custom_call.1} parent=1 // pred_fallthru
      _
    // Predicated region
    $region50: #{tpu_custom_call.1} parent=1 // pred_check
      _
    $region51: #{tpu_custom_call.1} parent=1 // pred_check_branch
      %766 = sbr.rel (0) target = $region53
    $region52: #{tpu_custom_call.1} parent=1 // pred_region
      %767 = dma.done [#allocation11], 32
    $region53: #{tpu_custom_call.1} parent=1 // pred_fallthru
      _
    // Predicated region
    $region54: #{tpu_custom_call.1} parent=1 // pred_check
      _
    $region55: #{tpu_custom_call.1} parent=1 // pred_check_branch
      %769 = sbr.rel (0) target = $region57
    $region56: #{tpu_custom_call.1} parent=1 // pred_region
      %770 = dma.done [#allocation11], 32
    $region57: #{tpu_custom_call.1} parent=1 // pred_fallthru
      _
    %771 = vsyncpa [#allocation5], 1
    %772 = vsyncpa [#allocation8], 1
    %773 = vsyncpa [#allocation6], 1
    %774 = vsyncpa [#allocation11], 1

</llo_original>
